<compile_context>
chip_gen: v7x
topology: tpu7x:2x2x1
jax: 0.10.0
libtpu: 0.0.40
codegen_flags: <defaults>
</compile_context>

<pallas_src>
import math

import jax
import jax.numpy as jnp
from jax.experimental import pallas as pl
from jax.experimental.pallas import tpu as pltpu


def _pselu_kernel(x_ref, a_ref, b_ref, o_ref):
    # x_ref: (bm, W) tile; a_ref/b_ref: (1, W), resident in VMEM for all steps.
    # Upcast to f32 for the VPU/EUP math (matters for bf16 inputs on v5e).
    x = x_ref[...].astype(jnp.float32)
    a = a_ref[...].astype(jnp.float32)
    b = b_ref[...].astype(jnp.float32)
    o_ref[...] = (jax.nn.sigmoid(x * a + b) * x).astype(o_ref.dtype)


def pselu(x, a, b, *, tile_rows=2048):
    """x: (..., D); a, b: (D,).  Returns sigmoid(x*a+b)*x with x's shape/dtype."""
    orig_shape = x.shape
    D = int(orig_shape[-1])
    rows = 1
    for s in orig_shape[:-1]:
        rows *= int(s)
    rows = max(rows, 1)

    # --- lane-dense folding: make the slab's last dim a multiple of 128 -----
    if D % 128 == 0:
        k = 1
    else:
        k = 128 // math.gcd(D, 128)        # smallest k with (k*D) % 128 == 0
        # Widen toward a ~512-wide lane slab, but never in a way that would
        # introduce row padding the minimal fold does not already need.
        while k * D < 512 and (rows % k != 0 or rows % (2 * k) == 0):
            k *= 2
    W = k * D

    itemsize = jnp.dtype(x.dtype).itemsize

    # --- tile sizing under a conservative cross-gen VMEM budget -------------
    # x + out tiles, each double-buffered: 4 * bm * W * itemsize bytes.
    TILE_VMEM_BUDGET = 24 * 1024 * 1024
    max_bm = TILE_VMEM_BUDGET // (4 * W * itemsize)
    max_bm = max(8, (max_bm // 8) * 8)
    bm = max(8, (int(tile_rows) // 8) * 8)
    bm = min(bm, int(max_bm))

    # Folded row count; pad only if the fold itself requires it (<= k-1 rows).
    rows_f = -(-rows // k)
    rows_pad = rows_f * k

    x2 = x.reshape(rows, D)
    if rows_pad != rows:
        x2 = jnp.pad(x2, ((0, rows_pad - rows), (0, 0)))
    xf = x2.reshape(rows_f, W)                 # free reshape when no padding
    af = jnp.tile(a.reshape(1, D), (1, k))     # (1, W): a[d] at lane r*D + d
    bf = jnp.tile(b.reshape(1, D), (1, k))

    if rows_f <= bm:
        bm = rows_f                            # single block == full extent
        grid = (1,)
    else:
        # Non-divisible grids are fine: the boundary block is masked by Pallas,
        # so no whole-array padding copy is needed for odd row counts.
        grid = (pl.cdiv(rows_f, bm),)

    need = 4 * bm * W * itemsize + 2 * W * jnp.dtype(a.dtype).itemsize
    vmem_limit = int(min(40 * 1024 * 1024,
                         max(16 * 1024 * 1024, int(need * 1.5))))

    out = pl.pallas_call(
        _pselu_kernel,
        out_shape=jax.ShapeDtypeStruct((rows_f, W), x.dtype),
        grid_spec=pltpu.PrefetchScalarGridSpec(
            num_scalar_prefetch=0,
            grid=grid,
            in_specs=[
                pl.BlockSpec((bm, W), lambda i: (i, 0)),
                # a/b are grid-invariant: keep them resident in VMEM, no
                # per-step double-buffered DMA stream.
                pl.BlockSpec(memory_space=pltpu.MemorySpace.VMEM),
                pl.BlockSpec(memory_space=pltpu.MemorySpace.VMEM),
            ],
            out_specs=pl.BlockSpec((bm, W), lambda i: (i, 0)),
        ),
        compiler_params=pltpu.CompilerParams(
            dimension_semantics=("parallel",),
            vmem_limit_bytes=vmem_limit,
        ),
    )(xf, af, bf)

    out = out.reshape(rows_pad, D)
    if rows_pad != rows:
        out = out[:rows]
    return out.reshape(orig_shape)


def _ref(x, a, b):
    return jax.nn.sigmoid(x * a + b) * x


if __name__ == "__main__":
    key = jax.random.PRNGKey(0)

    # Primary test matching the PyTorch module usage: (B, S, D) with
    # nn.Parameter(ones)/(zeros) init.
    B, S, D = 2, 8, 32
    x = jax.random.normal(key, (B, S, D), dtype=jnp.float32)
    a = jnp.ones((D,), dtype=jnp.float32)
    b = jnp.zeros((D,), dtype=jnp.float32)

    y = jax.block_until_ready(pselu(x, a, b))
    assert y.shape == x.shape and y.dtype == x.dtype
    assert jnp.allclose(y, _ref(x, a, b), atol=1e-6, rtol=1e-6)

    # Rows not divisible by the fold, non-trivial a/b, D % 128 != 0.
    k1, k2, k3 = jax.random.split(key, 3)
    x2 = jax.random.normal(k1, (3, 7, 160), dtype=jnp.float32)
    a2 = jax.random.normal(k2, (160,), dtype=jnp.float32)
    b2 = jax.random.normal(k3, (160,), dtype=jnp.float32)
    y2 = jax.block_until_ready(pselu(x2, a2, b2))
    assert jnp.allclose(y2, _ref(x2, a2, b2), atol=1e-5, rtol=1e-5)

    # Multi-step grid (small tile_rows forces several grid iterations).
    x3 = jax.random.normal(k1, (256, 32), dtype=jnp.float32)
    y3 = jax.block_until_ready(pselu(x3, a, b, tile_rows=8))
    assert jnp.allclose(y3, _ref(x3, a, b), atol=1e-6, rtol=1e-6)

    # Boundary block: folded rows not a multiple of the row tile (masked tail).
    x4 = jax.random.normal(k2, (136, 32), dtype=jnp.float32)
    y4 = jax.block_until_ready(pselu(x4, a, b, tile_rows=8))
    assert jnp.allclose(y4, _ref(x4, a, b), atol=1e-6, rtol=1e-6)

    # bf16 path (compute in f32, store in bf16).
    x5 = jax.random.normal(k3, (4, 8, 32), dtype=jnp.bfloat16)
    y5 = jax.block_until_ready(pselu(x5, a, b))
    assert y5.dtype == jnp.bfloat16
    assert jnp.allclose(y5.astype(jnp.float32),
                        _ref(x5.astype(jnp.float32), a, b), atol=2e-2, rtol=2e-2)

    print("KERNEL_OK")
</pallas_src>

<mosaic_0001>
module attributes {stable_mosaic.version = 11 : i64} {
  func.func @_pselu_kernel(%arg0: i32, %arg1: memref<1x512xf32, #tpu.memory_space<vmem>>, %arg2: memref<1x512xf32, #tpu.memory_space<vmem>>, %arg3: memref<1x512xf32, #tpu.memory_space<vmem>>, %arg4: memref<1x512xf32, #tpu.memory_space<vmem>>) attributes {dimension_semantics = [#tpu.dimension_semantics<parallel>], iteration_bounds = array<i64: 1>, scalar_prefetch = 0 : i64, scratch_operands = 0 : i64, tpu.core_type = #tpu.core_type<tc>, window_params = [{transform_indices = @transform_0, window_bounds = array<i64: 1, 512>}, {pipeline_mode = #tpu.pipeline_mode<synchronous>, transform_indices = @transform_1, window_bounds = array<i64: 1, 512>}, {pipeline_mode = #tpu.pipeline_mode<synchronous>, transform_indices = @transform_2, window_bounds = array<i64: 1, 512>}, {transform_indices = @transform_3, window_bounds = array<i64: 1, 512>}]} {
    %c0 = arith.constant 0 : index
    %c0_0 = arith.constant 0 : index
    %0 = vector.load %arg1[%c0, %c0_0] : memref<1x512xf32, #tpu.memory_space<vmem>>, vector<1x512xf32>
    %c0_1 = arith.constant 0 : index
    %c0_2 = arith.constant 0 : index
    %1 = vector.load %arg2[%c0_1, %c0_2] : memref<1x512xf32, #tpu.memory_space<vmem>>, vector<1x512xf32>
    %c0_3 = arith.constant 0 : index
    %c0_4 = arith.constant 0 : index
    %2 = vector.load %arg3[%c0_3, %c0_4] : memref<1x512xf32, #tpu.memory_space<vmem>>, vector<1x512xf32>
    %3 = arith.mulf %0, %1 : vector<1x512xf32>
    %4 = arith.addf %3, %2 : vector<1x512xf32>
    %5 = arith.negf %4 : vector<1x512xf32>
    %6 = math.exp %5 : vector<1x512xf32>
    %cst = arith.constant 1.000000e+00 : f32
    %7 = vector.broadcast %cst : f32 to vector<1x512xf32>
    %8 = arith.addf %7, %6 : vector<1x512xf32>
    %9 = arith.divf %7, %8 : vector<1x512xf32>
    %10 = arith.mulf %9, %0 : vector<1x512xf32>
    %c0_5 = arith.constant 0 : index
    %c0_6 = arith.constant 0 : index
    %11 = vector.load %arg4[%c0_5, %c0_6] : memref<1x512xf32, #tpu.memory_space<vmem>>, vector<1x512xf32>
    tpu.vector_store %arg4[%c0_5, %c0_6], %10 {strides = array<i32>} : memref<1x512xf32, #tpu.memory_space<vmem>>, vector<1x512xf32>,
    return
  }
  func.func @transform_0(%arg0: i32) -> (i32, i32) {
    %c0_i32 = arith.constant 0 : i32
    %c0_i32_0 = arith.constant 0 : i32
    return %arg0, %c0_i32 : i32, i32
  }
  func.func @transform_1(%arg0: i32) -> (i32, i32) {
    %c0_i32 = arith.constant 0 : i32
    %c0_i32_0 = arith.constant 0 : i32
    %c0_i32_1 = arith.constant 0 : i32
    return %c0_i32, %c0_i32_0 : i32, i32
  }
  func.func @transform_2(%arg0: i32) -> (i32, i32) {
    %c0_i32 = arith.constant 0 : i32
    %c0_i32_0 = arith.constant 0 : i32
    %c0_i32_1 = arith.constant 0 : i32
    return %c0_i32, %c0_i32_0 : i32, i32
  }
  func.func @transform_3(%arg0: i32) -> (i32, i32) {
    %c0_i32 = arith.constant 0 : i32
    %c0_i32_0 = arith.constant 0 : i32
    return %arg0, %c0_i32 : i32, i32
  }
}

</mosaic_0001>

<llo_original>
// kernel: tpu_custom_call.1
$region0: #{tpu_custom_call.1}
  #allocation0 [shape = 'u32[]', space=smem, size = 0x4, offset = 0x4, fixed_abs, tag = 'smem constant byte address 0x4 - core index']
  #allocation1 [shape = 'u32[144,128]{1,0:T(1,128)}', space=vmem, size = 0x12000, scoped, tag = 'internal scratch']
  %s0 = inlined_call_operand.hbm [shape: f32[1,512], index: 0, kind: input, shape index: {}]
  %s1 = inlined_call_operand.hbm [shape: f32[1,512], index: 1, kind: input, shape index: {}]
  %s2 = inlined_call_operand.vmem [shape: f32[1,512], index: 2, kind: input, shape index: {}]
  %s3 = inlined_call_operand.hbm [shape: f32[1,512], index: 3, kind: output, shape index: {}]
  %s4 = sld [smem:[#allocation0]]
  $region30: #{tpu_custom_call.1} parent=0
    _
  %s6 = ssub.s32 1, %s4
  %s7 = scalar_select 0, %s6, %s4
  $region1: #{tpu_custom_call.1} parent=0
    #allocation2 [shape = 'u8[2048]{0}', space=vmem, size = 0x800, scoped, tag = 'input window, operand 0, single buffered']
    #allocation3 [shape = 's32[1]{0}', space=sflag, size = 0x4, scoped, tag = 'scoped memory for tpu_custom_call.1']
    #allocation4 [shape = 's32[1]{0}', space=sflag, size = 0x4, scoped, tag = 'scoped memory for tpu_custom_call.1']
    #allocation5 [shape = 'u8[2048]{0}', space=vmem, size = 0x800, scoped, tag = 'input window, operand 1, single buffered']
    #allocation6 [shape = 's32[1]{0}', space=sflag, size = 0x4, scoped, tag = 'scoped memory for tpu_custom_call.1']
    #allocation7 [shape = 'u8[2048]{0}', space=vmem, size = 0x800, scoped, tag = 'output window, operand 0, single buffered']
    %8 = vsyncpa [#allocation3], 0
    %9 = vsyncpa [#allocation6], 0
    %10 = vsyncpa [#allocation4], 0
    // Predicated region
    $region2: #{tpu_custom_call.1} parent=1 // pred_check
      _
    $region3: #{tpu_custom_call.1} parent=1 // pred_check_branch
      %12 = sbr.rel (0) target = $region5
    $region4: #{tpu_custom_call.1} parent=1 // pred_region
      %s14 = ssub.s32 64, 64
      %15 = vsyncadd [#allocation3], %s14
      %s17 = sshll.u32 [#allocation2], 4
      %s18 = int_to_ptr.vmem [resolvable:$true] %s17
      %20 = dma.hbm_to_vmem [thread:$0]  %s0, 64, %s18, [#allocation3]
    $region5: #{tpu_custom_call.1} parent=1 // pred_fallthru
      _
    // Predicated region
    $region6: #{tpu_custom_call.1} parent=1 // pred_check
      _
    $region7: #{tpu_custom_call.1} parent=1 // pred_check_branch
      %22 = sbr.rel (0) target = $region9
    $region8: #{tpu_custom_call.1} parent=1 // pred_region
      %s24 = ssub.s32 64, 64
      %25 = vsyncadd [#allocation6], %s24
      %s27 = sshll.u32 [#allocation5], 4
      %s28 = int_to_ptr.vmem [resolvable:$true] %s27
      %30 = dma.hbm_to_vmem [thread:$0]  %s1, 64, %s28, [#allocation6]
    $region9: #{tpu_custom_call.1} parent=1 // pred_fallthru
      _
    // Predicated region
    $region10: #{tpu_custom_call.1} parent=1 // pred_check
      _
    $region11: #{tpu_custom_call.1} parent=1 // pred_check_branch
      %32 = sbr.rel (0) target = $region13
    $region12: #{tpu_custom_call.1} parent=1 // pred_region
      _
    $region13: #{tpu_custom_call.1} parent=1 // pred_fallthru
      _
    // Predicated region
    $region14: #{tpu_custom_call.1} parent=1 // pred_check
      _
    $region15: #{tpu_custom_call.1} parent=1 // pred_check_branch
      %34 = sbr.rel (0) target = $region17
    $region16: #{tpu_custom_call.1} parent=1 // pred_region
      %35 = dma.done [#allocation3], 64
    $region17: #{tpu_custom_call.1} parent=1 // pred_fallthru
      _
    // Predicated region
    $region18: #{tpu_custom_call.1} parent=1 // pred_check
      _
    $region19: #{tpu_custom_call.1} parent=1 // pred_check_branch
      %37 = sbr.rel (0) target = $region21
    $region20: #{tpu_custom_call.1} parent=1 // pred_region
      %38 = dma.done [#allocation6], 64
    $region21: #{tpu_custom_call.1} parent=1 // pred_fallthru
      _
    %v39 = vld [vmem:[#allocation2] sm:$0xf]
    %v40 = vld [vmem:[#allocation5] sm:$0xf]
    %v41 = vld [vmem:[%s2] sm:$0xf]
    %v42 = vmul.f32 %v39, %v40
    %v43 = vadd.f32 %v42, %v41
    %v44 = vxor.u32 %v43, 2147483648
    %v45 = vmul.f32 %v44, 1.442695
    %v46 = vpow.pop %v45
    %v47 = vadd.f32 %v46, 1.0
    %v48 = vrcp.pop %v47
    %v49 = vmul.f32 1.0, %v48
    %v50 = vmul.f32 %v49, %v39
    %v51 = vlaneseq
    %vm52 = vcmp.ge.s32.totalorder %v51, 0
    %vm53 = vcmp.lt.s32.totalorder %v51, 512
    %vm54 = vmand %vm52, %vm53
    %55 = vst.msk [vmem:[#allocation7] sm:$0xf] %vm54, %v50
    // Predicated region
    $region22: #{tpu_custom_call.1} parent=1 // pred_check
      _
    $region23: #{tpu_custom_call.1} parent=1 // pred_check_branch
      %57 = sbr.rel (0) target = $region25
    $region24: #{tpu_custom_call.1} parent=1 // pred_region
      %s59 = ssub.s32 64, 64
      %60 = vsyncadd [#allocation4], %s59
      %s62 = sshll.u32 [#allocation7], 4
      %s63 = int_to_ptr.vmem [resolvable:$true] %s62
      %65 = dma.vmem_to_hbm [thread:$0]  %s63, 64, %s3, [#allocation4]
    $region25: #{tpu_custom_call.1} parent=1 // pred_fallthru
      _
    // Predicated region
    $region26: #{tpu_custom_call.1} parent=1 // pred_check
      _
    $region27: #{tpu_custom_call.1} parent=1 // pred_check_branch
      %67 = sbr.rel (0) target = $region29
    $region28: #{tpu_custom_call.1} parent=1 // pred_region
      %68 = dma.done [#allocation4], 64
    $region29: #{tpu_custom_call.1} parent=1 // pred_fallthru
      _
    %69 = vsyncpa [#allocation3], 1
    %70 = vsyncpa [#allocation6], 1
    %71 = vsyncpa [#allocation4], 1

</llo_original>
